<compile_context>
chip_gen: v7x
topology: tpu7x:2x2x1
jax: 0.10.0
libtpu: 0.0.40
codegen_flags: <defaults>
</compile_context>

<pallas_src>
import functools

import numpy as np
import jax
import jax.numpy as jnp
from jax.experimental import pallas as pl
from jax.experimental.pallas import tpu as pltpu

_eps = 1e-08
_LANE = 128


def _round_up(n, m):
    return (n + m - 1) // m * m


def _apply_act(h, activation):
    if activation == "relu":
        return jnp.maximum(h, 0.0)
    if activation == "tanh":
        return jnp.tanh(h)
    if activation == "sigmoid":
        return jax.nn.sigmoid(h)
    raise ValueError(f"unsupported activation: {activation}")


def _batch_tiling(batch, max_tile=512):
    """Batch tile.  Single full block for tiny batches; otherwise >= 2 grid steps
    (so both v7x TensorCores get work) with a tile of up to `max_tile` rows."""
    if batch <= 64:
        return batch                                  # block == full dim, grid = 1
    bt = _round_up(pl.cdiv(batch, 2), 8)
    return min(bt, max_tile)


# --------------------------------------------------------------------------- #
# Fused VAE kernel                                                             #
#   encoder hidden layers -> posterior head (-> Cholesky assembly)             #
#   (-> MC sampling -> decoder -> output head)                                 #
# --------------------------------------------------------------------------- #
def _vae_kernel(*refs, n_enc, n_dec, has_chol, n_samples, activation, latent_dim):
    D = latent_dim
    idx = 0
    x_ref = refs[idx]; idx += 1
    eps_ref = None
    if n_samples > 0:
        eps_ref = refs[idx]; idx += 1
    enc_wb = refs[idx: idx + 2 * n_enc]; idx += 2 * n_enc
    scat_ref = dmask_ref = None
    if has_chol:
        scat_ref, dmask_ref = refs[idx], refs[idx + 1]; idx += 2
    tile_ref = sum_ref = None
    if n_samples > 0:
        tile_ref, sum_ref = refs[idx], refs[idx + 1]; idx += 2
    dec_wb = refs[idx: idx + 2 * n_dec]; idx += 2 * n_dec
    head_out = refs[idx]; idx += 1
    xgen_out = None
    if n_dec > 0:
        xgen_out = refs[idx]; idx += 1
    zs_out = None
    if n_samples > 0:
        zs_out = refs[idx]; idx += 1

    def chain(h, wb, n):
        # Linear (+activation on all but the last layer); f32 accumulation on the MXU.
        for l in range(n):
            w = wb[2 * l]
            b = wb[2 * l + 1]
            h = jnp.dot(h.astype(w.dtype), w[...],
                        preferred_element_type=jnp.float32) + b[...]
            if l < n - 1:
                h = _apply_act(h, activation)
        return h

    # ----- encoder + merged posterior head --------------------------------- #
    head = chain(x_ref[...], enc_wb, n_enc)            # (BT, head_cols) f32

    if has_chol:
        # head lanes: [0:D] = z_mean, [D:D+T] = packed tril entries.
        # scatter maps them to [0:D] = z_mean, [D:D+D*D] = flat row-major L;
        # the diagonal mask applies the 2*|.| + eps adjustment.
        raw = jnp.dot(head, scat_ref[...], preferred_element_type=jnp.float32)
        head = jnp.where(dmask_ref[...] > 0.5, 2.0 * jnp.abs(raw) + _eps, raw)

    head_out[...] = head.astype(head_out.dtype)

    if n_dec == 0:
        return

    mu = head[:, :D]                                   # (BT, D)

    if n_samples == 0:
        xgen_out[...] = chain(mu, dec_wb, n_dec).astype(xgen_out.dtype)
        return

    # ----- fused MC sampling + decoder -------------------------------------- #
    Lf = head[:, D:D + D * D]                          # (BT, D*D) flat row-major L
    for s in range(n_samples):
        e = eps_ref[s]                                 # (BT, D)
        # et[b, i*D+j] = e[b, j];  z[b, i] = mu[b, i] + sum_j L[b, i, j] * e[b, j]
        et = jnp.dot(e, tile_ref[...], preferred_element_type=jnp.float32)
        z = mu + jnp.dot(Lf * et, sum_ref[...], preferred_element_type=jnp.float32)
        zs_out[s] = z.astype(zs_out.dtype)
        xgen_out[s] = chain(z, dec_wb, n_dec).astype(xgen_out.dtype)
    zs_out[n_samples] = mu.astype(zs_out.dtype)
    xgen_out[n_samples] = chain(mu, dec_wb, n_dec).astype(xgen_out.dtype)


# --------------------------------------------------------------------------- #
# pallas_call wrapper                                                           #
# --------------------------------------------------------------------------- #
def _run_vae(x, packed, activation, *, n_samples, with_decoder, with_chol, eps=None):
    if n_samples > 0:
        assert with_chol and with_decoder and eps is not None

    B, K = x.shape
    D = packed["latent_dim"]
    enc_chain = list(packed["enc"]) + [packed["head_full"] if with_chol
                                       else packed["head_mean"]]
    dec_chain = list(packed["dec"]) if with_decoder else []
    n_enc, n_dec = len(enc_chain), len(dec_chain)

    BT = _batch_tiling(B)
    grid = (pl.cdiv(B, BT),)

    def const_spec(arr):
        nd = arr.ndim
        return pl.BlockSpec(arr.shape, lambda i, _n=nd: (0,) * _n)

    operands = [x]
    in_specs = [pl.BlockSpec((BT, K), lambda i: (i, 0))]
    if n_samples > 0:
        operands.append(eps)
        in_specs.append(pl.BlockSpec((n_samples, BT, D), lambda i: (0, i, 0)))
    for (w, b) in enc_chain:
        operands += [w, b]
        in_specs += [const_spec(w), const_spec(b)]
    if with_chol:
        operands += [packed["scatter"], packed["dmask"]]
        in_specs += [const_spec(packed["scatter"]), const_spec(packed["dmask"])]
    if n_samples > 0:
        operands += [packed["tile_mat"], packed["sum_mat"]]
        in_specs += [const_spec(packed["tile_mat"]), const_spec(packed["sum_mat"])]
    for (w, b) in dec_chain:
        operands += [w, b]
        in_specs += [const_spec(w), const_spec(b)]

    head_cols = (packed["scatter"].shape[1] if with_chol
                 else packed["head_mean"][0].shape[1])
    out_shapes = [jax.ShapeDtypeStruct((B, head_cols), jnp.float32)]
    out_specs = [pl.BlockSpec((BT, head_cols), lambda i: (i, 0))]
    if with_decoder:
        IP = dec_chain[-1][0].shape[1]
        if n_samples > 0:
            out_shapes.append(jax.ShapeDtypeStruct((n_samples + 1, B, IP), jnp.float32))
            out_specs.append(pl.BlockSpec((n_samples + 1, BT, IP), lambda i: (0, i, 0)))
        else:
            out_shapes.append(jax.ShapeDtypeStruct((B, IP), jnp.float32))
            out_specs.append(pl.BlockSpec((BT, IP), lambda i: (i, 0)))
    if n_samples > 0:
        out_shapes.append(jax.ShapeDtypeStruct((n_samples + 1, B, D), jnp.float32))
        out_specs.append(pl.BlockSpec((n_samples + 1, BT, D), lambda i: (0, i, 0)))

    kernel = functools.partial(_vae_kernel, n_enc=n_enc, n_dec=n_dec,
                               has_chol=with_chol, n_samples=n_samples,
                               activation=activation, latent_dim=D)
    outs = pl.pallas_call(
        kernel,
        out_shape=tuple(out_shapes),
        grid=grid,
        in_specs=in_specs,
        out_specs=tuple(out_specs),
        compiler_params=pltpu.CompilerParams(dimension_semantics=("parallel",)),
    )(*operands)
    return outs if isinstance(outs, tuple) else (outs,)


# --------------------------------------------------------------------------- #
# Parameter construction (PyTorch-Linear-style uniform init) + packing          #
# --------------------------------------------------------------------------- #
def _init_linear(key, fan_in, fan_out):
    kw, kb = jax.random.split(key)
    bound = 1.0 / float(fan_in) ** 0.5
    w = jax.random.uniform(kw, (fan_in, fan_out), jnp.float32, -bound, bound)
    b = jax.random.uniform(kb, (fan_out,), jnp.float32, -bound, bound)
    return w, b


def init_fullcov_vae(key, cfg):
    input_dim = cfg["num_joints"] * cfg["joint_dims"] * cfg["window_size"]
    enc_sizes = [input_dim] + list(cfg["hidden_sizes"])
    dec_sizes = [cfg["latent_dim"]] + list(cfg["hidden_sizes"])[::-1]
    D = cfg["latent_dim"]
    n_keys = (len(enc_sizes) - 1) + 2 + (len(dec_sizes) - 1) + 1
    keys = iter(jax.random.split(key, n_keys))
    params = {}
    params["encoder"] = [_init_linear(next(keys), enc_sizes[i], enc_sizes[i + 1])
                         for i in range(len(enc_sizes) - 1)]
    params["post_mean"] = _init_linear(next(keys), enc_sizes[-1], D)
    params["post_cholesky"] = _init_linear(next(keys), enc_sizes[-1],
                                           D * (D + 1) // 2)
    params["decoder"] = [_init_linear(next(keys), dec_sizes[i], dec_sizes[i + 1])
                         for i in range(len(dec_sizes) - 1)]
    params["output"] = _init_linear(next(keys), dec_sizes[-1], input_dim)
    return params


def pack_fullcov_vae(params, cfg, dtype=jnp.float32):
    """One-time packing: lane-dense (128) padding of output dims, true (unpadded) K
    on the first layer of each chain, merged post_mean/post_cholesky head, and the
    constant Cholesky scatter / diag-mask / sampling matrices."""
    D = cfg["latent_dim"]
    input_dim = cfg["num_joints"] * cfg["joint_dims"] * cfg["window_size"]

    def pad_layer(w, b, pad_k):
        kp = _round_up(w.shape[0], _LANE) if pad_k else w.shape[0]
        npad = _round_up(w.shape[1], _LANE)
        wp = jnp.zeros((kp, npad), dtype).at[:w.shape[0], :w.shape[1]].set(
            w.astype(dtype))
        bp = jnp.zeros((1, npad), jnp.float32).at[0, :b.shape[0]].set(b)
        return wp, bp

    enc = [pad_layer(w, b, pad_k=(i > 0))
           for i, (w, b) in enumerate(params["encoder"])]
    n_hidden = len(enc)

    wm, bm = params["post_mean"]
    wc, bc = params["post_cholesky"]
    head_full = pad_layer(jnp.concatenate([wm, wc], axis=1),
                          jnp.concatenate([bm, bc], axis=0),
                          pad_k=(n_hidden > 0))
    head_mean = pad_layer(wm, bm, pad_k=(n_hidden > 0))

    dec = [pad_layer(w, b, pad_k=(i > 0))
           for i, (w, b) in enumerate(params["decoder"])]
    dec.append(pad_layer(*params["output"], pad_k=(len(dec) > 0)))

    head_pad = head_full[0].shape[1]
    out_pad = _round_up(D + D * D, _LANE)

    # Scatter: z_mean passthrough + packed-tril -> flat row-major L (matches torch).
    S_mat = np.zeros((head_pad, out_pad), np.float32)
    S_mat[np.arange(D), np.arange(D)] = 1.0
    tr, tc = np.tril_indices(D)
    S_mat[D + np.arange(tr.shape[0]), D + tr * D + tc] = 1.0
    dmask = np.zeros((1, out_pad), np.float32)
    dmask[0, D + np.arange(D) * D + np.arange(D)] = 1.0

    # Sampling helpers: et = eps @ tile_mat replicates eps across rows of L;
    # (Lf * et) @ sum_mat reduces each row-of-L group -> L @ eps.
    tile_mat = np.zeros((D, D * D), np.float32)
    tile_mat[np.arange(D * D) % D, np.arange(D * D)] = 1.0
    sum_mat = np.zeros((D * D, D), np.float32)
    sum_mat[np.arange(D * D), np.arange(D * D) // D] = 1.0

    return dict(enc=enc, head_full=head_full, head_mean=head_mean, dec=dec,
                scatter=jnp.asarray(S_mat), dmask=jnp.asarray(dmask),
                tile_mat=jnp.asarray(tile_mat), sum_mat=jnp.asarray(sum_mat),
                input_dim=input_dim, latent_dim=D)


# --------------------------------------------------------------------------- #
# FullCovVAE.forward                                                           #
# --------------------------------------------------------------------------- #
def fullcov_vae_forward(x, packed, cfg, training=False, rng=None,
                        encode_only=False, dist_only=False):
    act = cfg["activation"].lower()          # 'ReLU' -> 'relu', 'Tanh' -> 'tanh'
    D = packed["latent_dim"]
    input_dim = packed["input_dim"]
    B = x.shape[0]

    if encode_only:
        (head,) = _run_vae(x, packed, act, n_samples=0,
                           with_decoder=False, with_chol=False)
        return head[:, :D]

    if dist_only:
        (head,) = _run_vae(x, packed, act, n_samples=0,
                           with_decoder=False, with_chol=True)
        z_mean = head[:, :D]
        z_chol = head[:, D:D + D * D].reshape(B, D, D)
        return (z_mean, z_chol)               # MultivariateNormal(mean, scale_tril) params

    if training:
        S = cfg["mce_samples"]
        eps = jax.random.normal(rng, (S, B, D), jnp.float32)
        head, xgen, zs = _run_vae(x, packed, act, n_samples=S,
                                  with_decoder=True, with_chol=True, eps=eps)
        z_mean = head[:, :D]
        z_chol = head[:, D:D + D * D].reshape(B, D, D)
        x_gen = xgen[:, :, :input_dim]
        zpost_samples = zs
    else:
        head, xgen = _run_vae(x, packed, act, n_samples=0,
                              with_decoder=True, with_chol=True)
        z_mean = head[:, :D]
        z_chol = head[:, D:D + D * D].reshape(B, D, D)
        x_gen = xgen[:, :input_dim]
        zpost_samples = z_mean

    return x_gen, zpost_samples, (z_mean, z_chol)


# --------------------------------------------------------------------------- #
# Pure-JAX reference for correctness checks                                    #
# --------------------------------------------------------------------------- #
def _ref_forward(x, params, cfg, training=False, rng=None, dtype=jnp.float32):
    act = cfg["activation"].lower()
    D = cfg["latent_dim"]
    hp = jax.lax.Precision.HIGHEST
    if dtype == jnp.float32:
        dot = lambda a, b: jnp.dot(a, b, precision=hp)
    else:
        dot = lambda a, b: jnp.dot(a.astype(dtype), b.astype(dtype),
                                   preferred_element_type=jnp.float32)
    h = x
    for w, b in params["encoder"]:
        h = _apply_act(dot(h, w) + b, act)
    z_mean = dot(h, params["post_mean"][0]) + params["post_mean"][1]
    z_std = dot(h, params["post_cholesky"][0]) + params["post_cholesky"][1]
    tr, tc = jnp.tril_indices(D)
    z_chol = jnp.zeros((x.shape[0], D, D), jnp.float32).at[:, tr, tc].set(z_std)
    di = jnp.arange(D)
    z_chol = z_chol.at[:, di, di].set(2.0 * jnp.abs(z_chol[:, di, di]) + _eps)
    if training:
        S = cfg["mce_samples"]
        eps = jax.random.normal(rng, (S, x.shape[0], D), jnp.float32)
        samples = z_mean[None] + jnp.einsum("bij,sbj->sbi", z_chol, eps, precision=hp)
        zpost = jnp.concatenate([samples, z_mean[None]], axis=0)
        dec_in = zpost.reshape(-1, D)
    else:
        zpost = z_mean
        dec_in = z_mean
    hd = dec_in
    for w, b in params["decoder"]:
        hd = _apply_act(dot(hd, w) + b, act)
    x_gen = dot(hd, params["output"][0]) + params["output"][1]
    if training:
        x_gen = x_gen.reshape(cfg["mce_samples"] + 1, x.shape[0], -1)
    return x_gen, zpost, z_mean, z_chol


# --------------------------------------------------------------------------- #
if __name__ == "__main__":
    cfg = dict(
        num_joints=4,
        joint_dims=3,
        window_size=8,          # input_dim = 4 * 3 * 8 = 96
        hidden_sizes=[64, 32],
        latent_dim=8,           # post_cholesky out = 8*9/2 = 36
        mce_samples=4,
        activation="ReLU",
    )
    key = jax.random.PRNGKey(0)
    kp, kx, kb, ks = jax.random.split(key, 4)
    params = init_fullcov_vae(kp, cfg)
    packed = pack_fullcov_vae(params, cfg)                     # f32 weights

    input_dim = cfg["num_joints"] * cfg["joint_dims"] * cfg["window_size"]
    D = cfg["latent_dim"]
    x = jax.random.normal(kx, (2, input_dim), jnp.float32)

    # --- eval forward (one fused kernel) ---
    x_gen, zpost_samples, (z_mean, z_chol) = fullcov_vae_forward(x, packed, cfg)
    jax.block_until_ready((x_gen, zpost_samples, z_mean, z_chol))
    assert x_gen.shape == (2, input_dim)
    assert zpost_samples.shape == (2, D)
    assert z_chol.shape == (2, D, D)

    xg_ref, _, zm_ref, zc_ref = _ref_forward(x, params, cfg)
    assert jnp.allclose(z_mean, zm_ref, rtol=2e-3, atol=2e-3)
    assert jnp.allclose(z_chol, zc_ref, rtol=2e-3, atol=2e-3)
    assert jnp.allclose(x_gen, xg_ref, rtol=2e-3, atol=2e-3)

    # --- encode_only / dist_only (cholesky head / decoder compiled out) ---
    zm_only = fullcov_vae_forward(x, packed, cfg, encode_only=True)
    assert jnp.allclose(zm_only, z_mean, rtol=2e-3, atol=2e-3)
    zm_d, zc_d = fullcov_vae_forward(x, packed, cfg, dist_only=True)
    assert jnp.allclose(zm_d, z_mean, rtol=2e-3, atol=2e-3)
    assert jnp.allclose(zc_d, z_chol, rtol=2e-3, atol=2e-3)

    # --- training forward: rsample fused into the same kernel ---
    x_gen_t, zs_t, _ = fullcov_vae_forward(x, packed, cfg, training=True, rng=ks)
    jax.block_until_ready((x_gen_t, zs_t))
    assert x_gen_t.shape == (cfg["mce_samples"] + 1, 2, input_dim)
    assert zs_t.shape == (cfg["mce_samples"] + 1, 2, D)
    xg_tref, zs_tref, _, _ = _ref_forward(x, params, cfg, training=True, rng=ks)
    assert jnp.allclose(zs_t, zs_tref, rtol=5e-3, atol=5e-3)
    assert jnp.allclose(x_gen_t, xg_tref, rtol=5e-3, atol=5e-3)

    # --- larger batch: multi-step grid (>= 2 tiles), partial last block, no padding ---
    xb = jax.random.normal(kb, (200, input_dim), jnp.float32)
    xg_b, _, (zm_b, zc_b) = fullcov_vae_forward(xb, packed, cfg)
    jax.block_until_ready(xg_b)
    xg_bref, _, zm_bref, _ = _ref_forward(xb, params, cfg)
    assert jnp.allclose(zm_b, zm_bref, rtol=2e-3, atol=2e-3)
    assert jnp.allclose(xg_b, xg_bref, rtol=2e-3, atol=2e-3)

    # --- bf16 weight packing (recommended on v6e/v7x: bf16 MXU inputs, f32 accumulate) ---
    packed_bf16 = pack_fullcov_vae(params, cfg, dtype=jnp.bfloat16)
    xg_h, _, (zm_h, zc_h) = fullcov_vae_forward(x, packed_bf16, cfg)
    jax.block_until_ready(xg_h)
    xg_href, _, zm_href, zc_href = _ref_forward(x, params, cfg, dtype=jnp.bfloat16)
    assert jnp.allclose(zm_h, zm_href, rtol=1e-2, atol=1e-2)
    assert jnp.allclose(zc_h, zc_href, rtol=1e-2, atol=1e-2)
    assert jnp.allclose(xg_h, xg_href, rtol=1e-2, atol=1e-2)

    print("KERNEL_OK")
</pallas_src>

<mosaic_0001>
module attributes {stable_mosaic.version = 11 : i64} {
  func.func @_vae_kernel(%arg0: i32, %arg1: memref<2x96xf32, #tpu.memory_space<vmem>>, %arg2: memref<96x128xf32, #tpu.memory_space<vmem>>, %arg3: memref<1x128xf32, #tpu.memory_space<vmem>>, %arg4: memref<128x128xf32, #tpu.memory_space<vmem>>, %arg5: memref<1x128xf32, #tpu.memory_space<vmem>>, %arg6: memref<128x128xf32, #tpu.memory_space<vmem>>, %arg7: memref<1x128xf32, #tpu.memory_space<vmem>>, %arg8: memref<128x128xf32, #tpu.memory_space<vmem>>, %arg9: memref<1x128xf32, #tpu.memory_space<vmem>>, %arg10: memref<8x128xf32, #tpu.memory_space<vmem>>, %arg11: memref<1x128xf32, #tpu.memory_space<vmem>>, %arg12: memref<128x128xf32, #tpu.memory_space<vmem>>, %arg13: memref<1x128xf32, #tpu.memory_space<vmem>>, %arg14: memref<128x128xf32, #tpu.memory_space<vmem>>, %arg15: memref<1x128xf32, #tpu.memory_space<vmem>>, %arg16: memref<2x128xf32, #tpu.memory_space<vmem>>, %arg17: memref<2x128xf32, #tpu.memory_space<vmem>>) attributes {dimension_semantics = [#tpu.dimension_semantics<parallel>], iteration_bounds = array<i64: 1>, scalar_prefetch = 0 : i64, scratch_operands = 0 : i64, tpu.core_type = #tpu.core_type<tc>, window_params = [{transform_indices = @transform_0, window_bounds = array<i64: 2, 96>}, {pipeline_mode = #tpu.pipeline_mode<synchronous>, transform_indices = @transform_1, window_bounds = array<i64: 96, 128>}, {pipeline_mode = #tpu.pipeline_mode<synchronous>, transform_indices = @transform_2, window_bounds = array<i64: 1, 128>}, {pipeline_mode = #tpu.pipeline_mode<synchronous>, transform_indices = @transform_3, window_bounds = array<i64: 128, 128>}, {pipeline_mode = #tpu.pipeline_mode<synchronous>, transform_indices = @transform_4, window_bounds = array<i64: 1, 128>}, {pipeline_mode = #tpu.pipeline_mode<synchronous>, transform_indices = @transform_5, window_bounds = array<i64: 128, 128>}, {pipeline_mode = #tpu.pipeline_mode<synchronous>, transform_indices = @transform_6, window_bounds = array<i64: 1, 128>}, {pipeline_mode = #tpu.pipeline_mode<synchronous>, transform_indices = @transform_7, window_bounds = array<i64: 128, 128>}, {pipeline_mode = #tpu.pipeline_mode<synchronous>, transform_indices = @transform_8, window_bounds = array<i64: 1, 128>}, {pipeline_mode = #tpu.pipeline_mode<synchronous>, transform_indices = @transform_9, window_bounds = array<i64: 8, 128>}, {pipeline_mode = #tpu.pipeline_mode<synchronous>, transform_indices = @transform_10, window_bounds = array<i64: 1, 128>}, {pipeline_mode = #tpu.pipeline_mode<synchronous>, transform_indices = @transform_11, window_bounds = array<i64: 128, 128>}, {pipeline_mode = #tpu.pipeline_mode<synchronous>, transform_indices = @transform_12, window_bounds = array<i64: 1, 128>}, {pipeline_mode = #tpu.pipeline_mode<synchronous>, transform_indices = @transform_13, window_bounds = array<i64: 128, 128>}, {pipeline_mode = #tpu.pipeline_mode<synchronous>, transform_indices = @transform_14, window_bounds = array<i64: 1, 128>}, {transform_indices = @transform_15, window_bounds = array<i64: 2, 128>}, {transform_indices = @transform_16, window_bounds = array<i64: 2, 128>}]} {
    %c0 = arith.constant 0 : index
    %c0_0 = arith.constant 0 : index
    %0 = vector.load %arg1[%c0, %c0_0] : memref<2x96xf32, #tpu.memory_space<vmem>>, vector<2x96xf32>
    %c0_1 = arith.constant 0 : index
    %c0_2 = arith.constant 0 : index
    %1 = vector.load %arg2[%c0_1, %c0_2] : memref<96x128xf32, #tpu.memory_space<vmem>>, vector<96x128xf32>
    %cst = arith.constant dense<0.000000e+00> : vector<2x128xf32>
    %2 = tpu.matmul %0, %1, %cst {dimension_numbers = #tpu.dot_dimension_numbers<[1], [0], [0], [1], [0, 0, 1, 1], [], []>} : vector<2x96xf32>, vector<96x128xf32>, vector<2x128xf32> -> vector<2x128xf32>
    %c0_3 = arith.constant 0 : index
    %c0_4 = arith.constant 0 : index
    %3 = vector.load %arg3[%c0_3, %c0_4] : memref<1x128xf32, #tpu.memory_space<vmem>>, vector<1x128xf32>
    %4 = vector.broadcast %3 : vector<1x128xf32> to vector<2x128xf32>
    %5 = arith.addf %2, %4 : vector<2x128xf32>
    %cst_5 = arith.constant 0.000000e+00 : f32
    %6 = vector.broadcast %cst_5 : f32 to vector<2x128xf32>
    %7 = arith.maximumf %5, %6 : vector<2x128xf32>
    %c0_6 = arith.constant 0 : index
    %c0_7 = arith.constant 0 : index
    %8 = vector.load %arg4[%c0_6, %c0_7] : memref<128x128xf32, #tpu.memory_space<vmem>>, vector<128x128xf32>
    %cst_8 = arith.constant dense<0.000000e+00> : vector<2x128xf32>
    %9 = tpu.matmul %7, %8, %cst_8 {dimension_numbers = #tpu.dot_dimension_numbers<[1], [0], [0], [1], [0, 0, 1, 1], [], []>} : vector<2x128xf32>, vector<128x128xf32>, vector<2x128xf32> -> vector<2x128xf32>
    %c0_9 = arith.constant 0 : index
    %c0_10 = arith.constant 0 : index
    %10 = vector.load %arg5[%c0_9, %c0_10] : memref<1x128xf32, #tpu.memory_space<vmem>>, vector<1x128xf32>
    %11 = vector.broadcast %10 : vector<1x128xf32> to vector<2x128xf32>
    %12 = arith.addf %9, %11 : vector<2x128xf32>
    %cst_11 = arith.constant 0.000000e+00 : f32
    %13 = vector.broadcast %cst_11 : f32 to vector<2x128xf32>
    %14 = arith.maximumf %12, %13 : vector<2x128xf32>
    %c0_12 = arith.constant 0 : index
    %c0_13 = arith.constant 0 : index
    %15 = vector.load %arg6[%c0_12, %c0_13] : memref<128x128xf32, #tpu.memory_space<vmem>>, vector<128x128xf32>
    %cst_14 = arith.constant dense<0.000000e+00> : vector<2x128xf32>
    %16 = tpu.matmul %14, %15, %cst_14 {dimension_numbers = #tpu.dot_dimension_numbers<[1], [0], [0], [1], [0, 0, 1, 1], [], []>} : vector<2x128xf32>, vector<128x128xf32>, vector<2x128xf32> -> vector<2x128xf32>
    %c0_15 = arith.constant 0 : index
    %c0_16 = arith.constant 0 : index
    %17 = vector.load %arg7[%c0_15, %c0_16] : memref<1x128xf32, #tpu.memory_space<vmem>>, vector<1x128xf32>
    %18 = vector.broadcast %17 : vector<1x128xf32> to vector<2x128xf32>
    %19 = arith.addf %16, %18 : vector<2x128xf32>
    %c0_17 = arith.constant 0 : index
    %c0_18 = arith.constant 0 : index
    %20 = vector.load %arg8[%c0_17, %c0_18] : memref<128x128xf32, #tpu.memory_space<vmem>>, vector<128x128xf32>
    %cst_19 = arith.constant dense<0.000000e+00> : vector<2x128xf32>
    %21 = tpu.matmul %19, %20, %cst_19 {dimension_numbers = #tpu.dot_dimension_numbers<[1], [0], [0], [1], [0, 0, 1, 1], [], []>} : vector<2x128xf32>, vector<128x128xf32>, vector<2x128xf32> -> vector<2x128xf32>
    %c0_20 = arith.constant 0 : index
    %c0_21 = arith.constant 0 : index
    %22 = vector.load %arg9[%c0_20, %c0_21] : memref<1x128xf32, #tpu.memory_space<vmem>>, vector<1x128xf32>
    %cst_22 = arith.constant 5.000000e-01 : f32
    %23 = vector.broadcast %cst_22 : f32 to vector<1x128xf32>
    %24 = arith.cmpf ogt, %22, %23 : vector<1x128xf32>
    %25 = math.absf %21 : vector<2x128xf32>
    %cst_23 = arith.constant 2.000000e+00 : f32
    %26 = vector.broadcast %cst_23 : f32 to vector<2x128xf32>
    %27 = arith.mulf %26, %25 : vector<2x128xf32>
    %cst_24 = arith.constant 9.99999993E-9 : f32
    %28 = vector.broadcast %cst_24 : f32 to vector<2x128xf32>
    %29 = arith.addf %27, %28 : vector<2x128xf32>
    %30 = vector.shape_cast %24 : vector<1x128xi1> to vector<1x128xi1>
    %31 = vector.broadcast %30 : vector<1x128xi1> to vector<2x128xi1>
    %32 = arith.select %31, %29, %21 : vector<2x128xi1>, vector<2x128xf32>
    %c0_25 = arith.constant 0 : index
    %c0_26 = arith.constant 0 : index
    %33 = vector.load %arg16[%c0_25, %c0_26] : memref<2x128xf32, #tpu.memory_space<vmem>>, vector<2x128xf32>
    tpu.vector_store %arg16[%c0_25, %c0_26], %32 {strides = array<i32>} : memref<2x128xf32, #tpu.memory_space<vmem>>, vector<2x128xf32>,
    %34 = vector.extract_strided_slice %32 {offsets = [0, 0], sizes = [2, 8], strides = [1, 1]} : vector<2x128xf32> to vector<2x8xf32>
    %c0_27 = arith.constant 0 : index
    %c0_28 = arith.constant 0 : index
    %35 = vector.load %arg10[%c0_27, %c0_28] : memref<8x128xf32, #tpu.memory_space<vmem>>, vector<8x128xf32>
    %cst_29 = arith.constant dense<0.000000e+00> : vector<2x128xf32>
    %36 = tpu.matmul %34, %35, %cst_29 {dimension_numbers = #tpu.dot_dimension_numbers<[1], [0], [0], [1], [0, 0, 1, 1], [], []>} : vector<2x8xf32>, vector<8x128xf32>, vector<2x128xf32> -> vector<2x128xf32>
    %c0_30 = arith.constant 0 : index
    %c0_31 = arith.constant 0 : index
    %37 = vector.load %arg11[%c0_30, %c0_31] : memref<1x128xf32, #tpu.memory_space<vmem>>, vector<1x128xf32>
    %38 = vector.broadcast %37 : vector<1x128xf32> to vector<2x128xf32>
    %39 = arith.addf %36, %38 : vector<2x128xf32>
    %cst_32 = arith.constant 0.000000e+00 : f32
    %40 = vector.broadcast %cst_32 : f32 to vector<2x128xf32>
    %41 = arith.maximumf %39, %40 : vector<2x128xf32>
    %c0_33 = arith.constant 0 : index
    %c0_34 = arith.constant 0 : index
    %42 = vector.load %arg12[%c0_33, %c0_34] : memref<128x128xf32, #tpu.memory_space<vmem>>, vector<128x128xf32>
    %cst_35 = arith.constant dense<0.000000e+00> : vector<2x128xf32>
    %43 = tpu.matmul %41, %42, %cst_35 {dimension_numbers = #tpu.dot_dimension_numbers<[1], [0], [0], [1], [0, 0, 1, 1], [], []>} : vector<2x128xf32>, vector<128x128xf32>, vector<2x128xf32> -> vector<2x128xf32>
    %c0_36 = arith.constant 0 : index
    %c0_37 = arith.constant 0 : index
    %44 = vector.load %arg13[%c0_36, %c0_37] : memref<1x128xf32, #tpu.memory_space<vmem>>, vector<1x128xf32>
    %45 = vector.broadcast %44 : vector<1x128xf32> to vector<2x128xf32>
    %46 = arith.addf %43, %45 : vector<2x128xf32>
    %cst_38 = arith.constant 0.000000e+00 : f32
    %47 = vector.broadcast %cst_38 : f32 to vector<2x128xf32>
    %48 = arith.maximumf %46, %47 : vector<2x128xf32>
    %c0_39 = arith.constant 0 : index
    %c0_40 = arith.constant 0 : index
    %49 = vector.load %arg14[%c0_39, %c0_40] : memref<128x128xf32, #tpu.memory_space<vmem>>, vector<128x128xf32>
    %cst_41 = arith.constant dense<0.000000e+00> : vector<2x128xf32>
    %50 = tpu.matmul %48, %49, %cst_41 {dimension_numbers = #tpu.dot_dimension_numbers<[1], [0], [0], [1], [0, 0, 1, 1], [], []>} : vector<2x128xf32>, vector<128x128xf32>, vector<2x128xf32> -> vector<2x128xf32>
    %c0_42 = arith.constant 0 : index
    %c0_43 = arith.constant 0 : index
    %51 = vector.load %arg15[%c0_42, %c0_43] : memref<1x128xf32, #tpu.memory_space<vmem>>, vector<1x128xf32>
    %52 = vector.broadcast %51 : vector<1x128xf32> to vector<2x128xf32>
    %53 = arith.addf %50, %52 : vector<2x128xf32>
    %c0_44 = arith.constant 0 : index
    %c0_45 = arith.constant 0 : index
    %54 = vector.load %arg17[%c0_44, %c0_45] : memref<2x128xf32, #tpu.memory_space<vmem>>, vector<2x128xf32>
    tpu.vector_store %arg17[%c0_44, %c0_45], %53 {strides = array<i32>} : memref<2x128xf32, #tpu.memory_space<vmem>>, vector<2x128xf32>,
    return
  }
  func.func @transform_0(%arg0: i32) -> (i32, i32) {
    %c0_i32 = arith.constant 0 : i32
    %c0_i32_0 = arith.constant 0 : i32
    return %arg0, %c0_i32 : i32, i32
  }
  func.func @transform_1(%arg0: i32) -> (i32, i32) {
    %c0_i32 = arith.constant 0 : i32
    %c0_i32_0 = arith.constant 0 : i32
    %c0_i32_1 = arith.constant 0 : i32
    return %c0_i32, %c0_i32_0 : i32, i32
  }
  func.func @transform_2(%arg0: i32) -> (i32, i32) {
    %c0_i32 = arith.constant 0 : i32
    %c0_i32_0 = arith.constant 0 : i32
    %c0_i32_1 = arith.constant 0 : i32
    return %c0_i32, %c0_i32_0 : i32, i32
  }
  func.func @transform_3(%arg0: i32) -> (i32, i32) {
    %c0_i32 = arith.constant 0 : i32
    %c0_i32_0 = arith.constant 0 : i32
    %c0_i32_1 = arith.constant 0 : i32
    return %c0_i32, %c0_i32_0 : i32, i32
  }
  func.func @transform_4(%arg0: i32) -> (i32, i32) {
    %c0_i32 = arith.constant 0 : i32
    %c0_i32_0 = arith.constant 0 : i32
    %c0_i32_1 = arith.constant 0 : i32
    return %c0_i32, %c0_i32_0 : i32, i32
  }
  func.func @transform_5(%arg0: i32) -> (i32, i32) {
    %c0_i32 = arith.constant 0 : i32
    %c0_i32_0 = arith.constant 0 : i32
    %c0_i32_1 = arith.constant 0 : i32
    return %c0_i32, %c0_i32_0 : i32, i32
  }
  func.func @transform_6(%arg0: i32) -> (i32, i32) {
    %c0_i32 = arith.constant 0 : i32
    %c0_i32_0 = arith.constant 0 : i32
    %c0_i32_1 = arith.constant 0 : i32
    return %c0_i32, %c0_i32_0 : i32, i32
  }
  func.func @transform_7(%arg0: i32) -> (i32, i32) {
    %c0_i32 = arith.constant 0 : i32
    %c0_i32_0 = arith.constant 0 : i32
    %c0_i32_1 = arith.constant 0 : i32
    return %c0_i32, %c0_i32_0 : i32, i32
  }
  func.func @transform_8(%arg0: i32) -> (i32, i32) {
    %c0_i32 = arith.constant 0 : i32
    %c0_i32_0 = arith.constant 0 : i32
    %c0_i32_1 = arith.constant 0 : i32
    return %c0_i32, %c0_i32_0 : i32, i32
  }
  func.func @transform_9(%arg0: i32) -> (i32, i32) {
    %c0_i32 = arith.constant 0 : i32
    %c0_i32_0 = arith.constant 0 : i32
    %c0_i32_1 = arith.constant 0 : i32
    return %c0_i32, %c0_i32_0 : i32, i32
  }
  func.func @transform_10(%arg0: i32) -> (i32, i32) {
    %c0_i32 = arith.constant 0 : i32
    %c0_i32_0 = arith.constant 0 : i32
    %c0_i32_1 = arith.constant 0 : i32
    return %c0_i32, %c0_i32_0 : i32, i32
  }
  func.func @transform_11(%arg0: i32) -> (i32, i32) {
    %c0_i32 = arith.constant 0 : i32
    %c0_i32_0 = arith.constant 0 : i32
    %c0_i32_1 = arith.constant 0 : i32
    return %c0_i32, %c0_i32_0 : i32, i32
  }
  func.func @transform_12(%arg0: i32) -> (i32, i32) {
    %c0_i32 = arith.constant 0 : i32
    %c0_i32_0 = arith.constant 0 : i32
    %c0_i32_1 = arith.constant 0 : i32
    return %c0_i32, %c0_i32_0 : i32, i32
  }
  func.func @transform_13(%arg0: i32) -> (i32, i32) {
    %c0_i32 = arith.constant 0 : i32
    %c0_i32_0 = arith.constant 0 : i32
    %c0_i32_1 = arith.constant 0 : i32
    return %c0_i32, %c0_i32_0 : i32, i32
  }
  func.func @transform_14(%arg0: i32) -> (i32, i32) {
    %c0_i32 = arith.constant 0 : i32
    %c0_i32_0 = arith.constant 0 : i32
    %c0_i32_1 = arith.constant 0 : i32
    return %c0_i32, %c0_i32_0 : i32, i32
  }
  func.func @transform_15(%arg0: i32) -> (i32, i32) {
    %c0_i32 = arith.constant 0 : i32
    %c0_i32_0 = arith.constant 0 : i32
    return %arg0, %c0_i32 : i32, i32
  }
  func.func @transform_16(%arg0: i32) -> (i32, i32) {
    %c0_i32 = arith.constant 0 : i32
    %c0_i32_0 = arith.constant 0 : i32
    return %arg0, %c0_i32 : i32, i32
  }
}

</mosaic_0001>

<llo_original>
// kernel: tpu_custom_call.1
$region0: #{tpu_custom_call.1}
  #allocation0 [shape = 'u32[]', space=smem, size = 0x4, offset = 0x4, fixed_abs, tag = 'smem constant byte address 0x4 - core index']
  #allocation1 [shape = 'u32[144,128]{1,0:T(1,128)}', space=vmem, size = 0x12000, scoped, tag = 'internal scratch']
  %s0 = inlined_call_operand.hbm [shape: f32[2,96], index: 0, kind: input, shape index: {}]
  %s1 = inlined_call_operand.hbm [shape: f32[96,128], index: 1, kind: input, shape index: {}]
  %s2 = inlined_call_operand.vmem [shape: f32[1,128], index: 2, kind: input, shape index: {}]
  %s3 = inlined_call_operand.hbm [shape: f32[128,128], index: 3, kind: input, shape index: {}]
  %s4 = inlined_call_operand.vmem [shape: f32[1,128], index: 4, kind: input, shape index: {}]
  %s5 = inlined_call_operand.hbm [shape: f32[128,128], index: 5, kind: input, shape index: {}]
  %s6 = inlined_call_operand.vmem [shape: f32[1,128], index: 6, kind: input, shape index: {}]
  %s7 = inlined_call_operand.hbm [shape: f32[128,128], index: 7, kind: input, shape index: {}]
  %s8 = inlined_call_operand.vmem [shape: f32[1,128], index: 8, kind: input, shape index: {}]
  %s9 = inlined_call_operand.vmem [shape: f32[8,128], index: 9, kind: input, shape index: {}]
  %s10 = inlined_call_operand.vmem [shape: f32[1,128], index: 10, kind: input, shape index: {}]
  %s11 = inlined_call_operand.hbm [shape: f32[128,128], index: 11, kind: input, shape index: {}]
  %s12 = inlined_call_operand.vmem [shape: f32[1,128], index: 12, kind: input, shape index: {}]
  %s13 = inlined_call_operand.hbm [shape: f32[128,128], index: 13, kind: input, shape index: {}]
  %s14 = inlined_call_operand.vmem [shape: f32[1,128], index: 14, kind: input, shape index: {}]
  %s15 = inlined_call_operand.hbm [shape: f32[2,128], index: 15, kind: output, shape index: {0}]
  %s16 = inlined_call_operand.hbm [shape: f32[2,128], index: 16, kind: output, shape index: {1}]
  %17 = xla_tuple %s15, %s16
  %s18 = sld [smem:[#allocation0]]
  $region106: #{tpu_custom_call.1} parent=0
    _
  %s20 = ssub.s32 1, %s18
  %s21 = scalar_select 0, %s20, %s18
  $region1: #{tpu_custom_call.1} parent=0
    #allocation2 [shape = 'u8[1024]{0}', space=vmem, size = 0x400, scoped, tag = 'input window, operand 0, single buffered']
    #allocation3 [shape = 's32[1]{0}', space=sflag, size = 0x4, scoped, tag = 'scoped memory for tpu_custom_call.1']
    #allocation4 [shape = 's32[1]{0}', space=sflag, size = 0x4, scoped, tag = 'scoped memory for tpu_custom_call.1']
    #allocation5 [shape = 'u8[49152]{0}', space=vmem, size = 0xc000, scoped, tag = 'input window, operand 1, single buffered']
    #allocation6 [shape = 's32[1]{0}', space=sflag, size = 0x4, scoped, tag = 'scoped memory for tpu_custom_call.1']
    #allocation7 [shape = 'u8[65536]{0}', space=vmem, size = 0x10000, scoped, tag = 'input window, operand 3, single buffered']
    #allocation8 [shape = 'u8[65536]{0}', space=vmem, size = 0x10000, scoped, tag = 'input window, operand 5, single buffered']
    #allocation9 [shape = 's32[1]{0}', space=sflag, size = 0x4, scoped, tag = 'scoped memory for tpu_custom_call.1']
    #allocation10 [shape = 'u8[65536]{0}', space=vmem, size = 0x10000, scoped, tag = 'input window, operand 7, single buffered']
    #allocation11 [shape = 'u8[65536]{0}', space=vmem, size = 0x10000, scoped, tag = 'input window, operand 11, single buffered']
    #allocation12 [shape = 's32[1]{0}', space=sflag, size = 0x4, scoped, tag = 'scoped memory for tpu_custom_call.1']
    #allocation13 [shape = 'u8[65536]{0}', space=vmem, size = 0x10000, scoped, tag = 'input window, operand 13, single buffered']
    #allocation14 [shape = 'u8[1024]{0}', space=vmem, size = 0x400, scoped, tag = 'output window, operand 0, single buffered']
    #allocation15 [shape = 'u8[1024]{0}', space=vmem, size = 0x400, scoped, tag = 'output window, operand 1, single buffered']
    #allocation16 [shape = 's32[1]{0}', space=sflag, size = 0x4, scoped, tag = 'scoped memory for tpu_custom_call.1']
    %22 = vsyncpa [#allocation3], 0
    %23 = vsyncpa [#allocation6], 0
    %24 = vsyncpa [#allocation9], 0
    %25 = vsyncpa [#allocation12], 0
    %26 = vsyncpa [#allocation4], 0
    %27 = vsyncpa [#allocation16], 0
    // Predicated region
    $region2: #{tpu_custom_call.1} parent=1 // pred_check
      _
    $region3: #{tpu_custom_call.1} parent=1 // pred_check_branch
      %29 = sbr.rel (0) target = $region5
    $region4: #{tpu_custom_call.1} parent=1 // pred_region
      %s31 = ssub.s32 32, 32
      %32 = vsyncadd [#allocation3], %s31
      %s34 = sshll.u32 [#allocation2], 4
      %s35 = int_to_ptr.vmem [resolvable:$true] %s34
      %37 = dma.hbm_to_vmem [thread:$0]  %s0, 32, %s35, [#allocation3]
    $region5: #{tpu_custom_call.1} parent=1 // pred_fallthru
      _
    // Predicated region
    $region6: #{tpu_custom_call.1} parent=1 // pred_check
      _
    $region7: #{tpu_custom_call.1} parent=1 // pred_check_branch
      %39 = sbr.rel (0) target = $region9
    $region8: #{tpu_custom_call.1} parent=1 // pred_region
      %s41 = ssub.s32 1536, 1536
      %42 = vsyncadd [#allocation6], %s41
      %s43 = sshll.u32 [#allocation5], 4
      %s44 = int_to_ptr.vmem [resolvable:$true] %s43
      %49 = dma.hbm_to_vmem [thread:$0]  %s1, 1536, %s44, [#allocation6], 128, 128, 8
    $region9: #{tpu_custom_call.1} parent=1 // pred_fallthru
      _
    // Predicated region
    $region10: #{tpu_custom_call.1} parent=1 // pred_check
      _
    $region11: #{tpu_custom_call.1} parent=1 // pred_check_branch
      %51 = sbr.rel (0) target = $region13
    $region12: #{tpu_custom_call.1} parent=1 // pred_region
      _
    $region13: #{tpu_custom_call.1} parent=1 // pred_fallthru
      _
    // Predicated region
    $region14: #{tpu_custom_call.1} parent=1 // pred_check
      _
    $region15: #{tpu_custom_call.1} parent=1 // pred_check_branch
      %53 = sbr.rel (0) target = $region17
    $region16: #{tpu_custom_call.1} parent=1 // pred_region
      %s55 = ssub.s32 2048, 2048
      %56 = vsyncadd [#allocation6], %s55
      %s57 = sshll.u32 [#allocation7], 4
      %s58 = int_to_ptr.vmem [resolvable:$true] %s57
      %63 = dma.hbm_to_vmem [thread:$0]  %s3, 2048, %s58, [#allocation6], 128, 128, 8
    $region17: #{tpu_custom_call.1} parent=1 // pred_fallthru
      _
    // Predicated region
    $region18: #{tpu_custom_call.1} parent=1 // pred_check
      _
    $region19: #{tpu_custom_call.1} parent=1 // pred_check_branch
      %65 = sbr.rel (0) target = $region21
    $region20: #{tpu_custom_call.1} parent=1 // pred_region
      _
    $region21: #{tpu_custom_call.1} parent=1 // pred_fallthru
      _
    // Predicated region
    $region22: #{tpu_custom_call.1} parent=1 // pred_check
      _
    $region23: #{tpu_custom_call.1} parent=1 // pred_check_branch
      %67 = sbr.rel (0) target = $region25
    $region24: #{tpu_custom_call.1} parent=1 // pred_region
      %s69 = ssub.s32 2048, 2048
      %70 = vsyncadd [#allocation9], %s69
      %s71 = sshll.u32 [#allocation8], 4
      %s72 = int_to_ptr.vmem [resolvable:$true] %s71
      %77 = dma.hbm_to_vmem [thread:$0]  %s5, 2048, %s72, [#allocation9], 128, 128, 8
    $region25: #{tpu_custom_call.1} parent=1 // pred_fallthru
      _
    // Predicated region
    $region26: #{tpu_custom_call.1} parent=1 // pred_check
      _
    $region27: #{tpu_custom_call.1} parent=1 // pred_check_branch
      %79 = sbr.rel (0) target = $region29
    $region28: #{tpu_custom_call.1} parent=1 // pred_region
      _
    $region29: #{tpu_custom_call.1} parent=1 // pred_fallthru
      _
    // Predicated region
    $region30: #{tpu_custom_call.1} parent=1 // pred_check
      _
    $region31: #{tpu_custom_call.1} parent=1 // pred_check_branch
      %81 = sbr.rel (0) target = $region33
    $region32: #{tpu_custom_call.1} parent=1 // pred_region
      %s83 = ssub.s32 2048, 2048
      %84 = vsyncadd [#allocation9], %s83
      %s85 = sshll.u32 [#allocation10], 4
      %s86 = int_to_ptr.vmem [resolvable:$true] %s85
      %91 = dma.hbm_to_vmem [thread:$0]  %s7, 2048, %s86, [#allocation9], 128, 128, 8
    $region33: #{tpu_custom_call.1} parent=1 // pred_fallthru
      _
    // Predicated region
    $region34: #{tpu_custom_call.1} parent=1 // pred_check
      _
    $region35: #{tpu_custom_call.1} parent=1 // pred_check_branch
      %93 = sbr.rel (0) target = $region37
    $region36: #{tpu_custom_call.1} parent=1 // pred_region
      _
    $region37: #{tpu_custom_call.1} parent=1 // pred_fallthru
      _
    // Predicated region
    $region38: #{tpu_custom_call.1} parent=1 // pred_check
      _
    $region39: #{tpu_custom_call.1} parent=1 // pred_check_branch
      %95 = sbr.rel (0) target = $region41
    $region40: #{tpu_custom_call.1} parent=1 // pred_region
      _
    $region41: #{tpu_custom_call.1} parent=1 // pred_fallthru
      _
    // Predicated region
    $region42: #{tpu_custom_call.1} parent=1 // pred_check
      _
    $region43: #{tpu_custom_call.1} parent=1 // pred_check_branch
      %97 = sbr.rel (0) target = $region45
    $region44: #{tpu_custom_call.1} parent=1 // pred_region
      _
    $region45: #{tpu_custom_call.1} parent=1 // pred_fallthru
      _
    // Predicated region
    $region46: #{tpu_custom_call.1} parent=1 // pred_check
      _
    $region47: #{tpu_custom_call.1} parent=1 // pred_check_branch
      %99 = sbr.rel (0) target = $region49
    $region48: #{tpu_custom_call.1} parent=1 // pred_region
      %s101 = ssub.s32 2048, 2048
      %102 = vsyncadd [#allocation12], %s101
      %s103 = sshll.u32 [#allocation11], 4
      %s104 = int_to_ptr.vmem [resolvable:$true] %s103
      %109 = dma.hbm_to_vmem [thread:$0]  %s11, 2048, %s104, [#allocation12], 128, 128, 8
    $region49: #{tpu_custom_call.1} parent=1 // pred_fallthru
      _
    // Predicated region
    $region50: #{tpu_custom_call.1} parent=1 // pred_check
      _
    $region51: #{tpu_custom_call.1} parent=1 // pred_check_branch
      %111 = sbr.rel (0) target = $region53
    $region52: #{tpu_custom_call.1} parent=1 // pred_region
      _
    $region53: #{tpu_custom_call.1} parent=1 // pred_fallthru
      _
    // Predicated region
    $region54: #{tpu_custom_call.1} parent=1 // pred_check
      _
    $region55: #{tpu_custom_call.1} parent=1 // pred_check_branch
      %113 = sbr.rel (0) target = $region57
    $region56: #{tpu_custom_call.1} parent=1 // pred_region
      %s115 = ssub.s32 2048, 2048
      %116 = vsyncadd [#allocation12], %s115
      %s117 = sshll.u32 [#allocation13], 4
      %s118 = int_to_ptr.vmem [resolvable:$true] %s117
      %123 = dma.hbm_to_vmem [thread:$0]  %s13, 2048, %s118, [#allocation12], 128, 128, 8
    $region57: #{tpu_custom_call.1} parent=1 // pred_fallthru
      _
    // Predicated region
    $region58: #{tpu_custom_call.1} parent=1 // pred_check
      _
    $region59: #{tpu_custom_call.1} parent=1 // pred_check_branch
      %125 = sbr.rel (0) target = $region61
    $region60: #{tpu_custom_call.1} parent=1 // pred_region
      _
    $region61: #{tpu_custom_call.1} parent=1 // pred_fallthru
      _
    // Predicated region
    $region62: #{tpu_custom_call.1} parent=1 // pred_check
      _
    $region63: #{tpu_custom_call.1} parent=1 // pred_check_branch
      %127 = sbr.rel (0) target = $region65
    $region64: #{tpu_custom_call.1} parent=1 // pred_region
      %128 = dma.done [#allocation3], 32
    $region65: #{tpu_custom_call.1} parent=1 // pred_fallthru
      _
    // Predicated region
    $region66: #{tpu_custom_call.1} parent=1 // pred_check
      _
    $region67: #{tpu_custom_call.1} parent=1 // pred_check_branch
      %130 = sbr.rel (0) target = $region69
    $region68: #{tpu_custom_call.1} parent=1 // pred_region
      %131 = dma.done [#allocation6], 1536
    $region69: #{tpu_custom_call.1} parent=1 // pred_fallthru
      _
    // Predicated region
    $region70: #{tpu_custom_call.1} parent=1 // pred_check
      _
    $region71: #{tpu_custom_call.1} parent=1 // pred_check_branch
      %133 = sbr.rel (0) target = $region73
    $region72: #{tpu_custom_call.1} parent=1 // pred_region
      %134 = dma.done [#allocation6], 2048
    $region73: #{tpu_custom_call.1} parent=1 // pred_fallthru
      _
    // Predicated region
    $region74: #{tpu_custom_call.1} parent=1 // pred_check
      _
    $region75: #{tpu_custom_call.1} parent=1 // pred_check_branch
      %136 = sbr.rel (0) target = $region77
    $region76: #{tpu_custom_call.1} parent=1 // pred_region
      %137 = dma.done [#allocation9], 2048
    $region77: #{tpu_custom_call.1} parent=1 // pred_fallthru
      _
    // Predicated region
    $region78: #{tpu_custom_call.1} parent=1 // pred_check
      _
    $region79: #{tpu_custom_call.1} parent=1 // pred_check_branch
      %139 = sbr.rel (0) target = $region81
    $region80: #{tpu_custom_call.1} parent=1 // pred_region
      %140 = dma.done [#allocation9], 2048
    $region81: #{tpu_custom_call.1} parent=1 // pred_fallthru
      _
    // Predicated region
    $region82: #{tpu_custom_call.1} parent=1 // pred_check
      _
    $region83: #{tpu_custom_call.1} parent=1 // pred_check_branch
      %142 = sbr.rel (0) target = $region85
    $region84: #{tpu_custom_call.1} parent=1 // pred_region
      %143 = dma.done [#allocation12], 2048
    $region85: #{tpu_custom_call.1} parent=1 // pred_fallthru
      _
    // Predicated region
    $region86: #{tpu_custom_call.1} parent=1 // pred_check
      _
    $region87: #{tpu_custom_call.1} parent=1 // pred_check_branch
      %145 = sbr.rel (0) target = $region89
    $region88: #{tpu_custom_call.1} parent=1 // pred_region
      %146 = dma.done [#allocation12], 2048
    $region89: #{tpu_custom_call.1} parent=1 // pred_fallthru
      _
    %v147 = vld [vmem:[#allocation2] sm:$0x3]
    %v148 = vld [vmem:[#allocation5] sm:$0xff]
    %v149 = vld [vmem:[#allocation5 + $0x8] sm:$0xff]
    %v150 = vld [vmem:[#allocation5 + $0x10] sm:$0xff]
    %v151 = vld [vmem:[#allocation5 + $0x18] sm:$0xff]
    %v152 = vld [vmem:[#allocation5 + $0x20] sm:$0xff]
    %v153 = vld [vmem:[#allocation5 + $0x28] sm:$0xff]
    %v154 = vld [vmem:[#allocation5 + $0x30] sm:$0xff]
    %v155 = vld [vmem:[#allocation5 + $0x38] sm:$0xff]
    %v156 = vld [vmem:[#allocation5 + $0x40] sm:$0xff]
    %v157 = vld [vmem:[#allocation5 + $0x48] sm:$0xff]
    %v158 = vld [vmem:[#allocation5 + $0x50] sm:$0xff]
    %v159 = vld [vmem:[#allocation5 + $0x58] sm:$0xff]
    %v160 = vld [vmem:[%s2] sm:$0x1]
    %v162 = vlaneseq
    %v163 = vshrl.u32 %v162, 7
    %v164 = vsub.s32 0, %v163
    %v165 = vrot.slane %v160, %v164
    %vm167 = vcmask 785408
    %v169 = vsel %vm167, %v147, 0
    %171 = vmatprep.subr.mxu0 0.0
    %172 = vmatpush1.msra.mxu0 %v148
    %173 = vmatprep.subr.mxu0 0.0
    %174 = vmatpush1.msra.mxu0 %v149
    %175 = vmatprep.subr.mxu0 0.0
    %176 = vmatpush1.msra.mxu0 %v150
    %177 = vmatprep.subr.mxu0 0.0
    %178 = vmatpush1.msra.mxu0 %v151
    %179 = vmatprep.subr.mxu0 0.0
    %180 = vmatpush1.msra.mxu0 %v152
    %181 = vmatprep.subr.mxu0 0.0
    %182 = vmatpush1.msra.mxu0 %v153
    %183 = vmatprep.subr.mxu0 0.0
    %184 = vmatpush1.msra.mxu0 %v154
    %185 = vmatprep.subr.mxu0 0.0
    %186 = vmatpush1.msra.mxu0 %v155
    %187 = vmatprep.subr.mxu0 0.0
    %188 = vmatpush1.msra.mxu0 %v156
    %189 = vmatprep.subr.mxu0 0.0
    %190 = vmatpush1.msra.mxu0 %v157
    %191 = vmatprep.subr.mxu0 0.0
    %192 = vmatpush1.msra.mxu0 %v158
    %193 = vmatprep.subr.mxu0 0.0
    %194 = vmatpush1.msra.mxu0 %v159
    %195 = vmatprep.subr.mxu0 0.0
    %196 = vmatpush1.msra.mxu0 0.0
    %197 = vmatprep.subr.mxu0 0.0
    %198 = vmatpush1.msra.mxu0 0.0
    %199 = vmatprep.subr.mxu0 0.0
    %200 = vmatpush1.msra.mxu0 0.0
    %201 = vmatprep.subr.mxu0 0.0
    %202 = vmatpush1.msra.mxu0 0.0
    %203 = vmatprep.subr.mxu0 0.0
    %204 = vmatpush1.msra.mxu0 0.0
    %205 = vmatprep.subr.mxu0 0.0
    %206 = vmatpush1.msra.mxu0 0.0
    %207 = vmatprep.subr.mxu0 0.0
    %208 = vmatpush1.msra.mxu0 0.0
    %209 = vmatprep.subr.mxu0 0.0
    %210 = vmatpush1.msra.mxu0 0.0
    %211 = vmatprep.subr.mxu0 0.0
    %212 = vmatpush1.msra.mxu0 0.0
    %213 = vmatprep.subr.mxu0 0.0
    %214 = vmatpush1.msra.mxu0 0.0
    %215 = vmatprep.subr.mxu0 0.0
    %216 = vmatpush1.msra.mxu0 0.0
    %217 = vmatprep.subr.mxu0 0.0
    %218 = vmatpush1.msra.mxu0 0.0
    %219 = vmatprep.subr.mxu0 0.0
    %220 = vmatpush1.msra.mxu0 0.0
    %221 = vmatprep.subr.mxu0 0.0
    %222 = vmatpush1.msra.mxu0 0.0
    %223 = vmatprep.subr.mxu0 0.0
    %224 = vmatpush1.msra.mxu0 0.0
    %225 = vmatprep.subr.mxu0 0.0
    %226 = vmatpush1.msra.mxu0 0.0
    %227 = vmatprep.subr.mxu0 0.0
    %228 = vmatpush1.msra.mxu0 0.0
    %229 = vmatprep.subr.mxu0 0.0
    %230 = vmatpush1.msra.mxu0 0.0
    %231 = vmatprep.subr.mxu0 0.0
    %232 = vmatpush1.msra.mxu0 0.0
    %233 = vmatprep.subr.mxu0 0.0
    %234 = vmatpush1.msra.mxu0 0.0
    %235 = vmatprep.mubr.f32.mxu0 0.0
    %236 = vmatmul.mubr.f32.gmra.mrb[0].mxu0 %v169
    %v237 = vpop.f32.mrb[0].mxu0
    %v238 = vadd.f32 %v165, %v237
    %v239 = vpop.f32.mrb[0].mxu0
    %240 = vdwg.mxu0
    %v241 = vmax.f32 %v238, 0.0
    %v242 = vld [vmem:[#allocation7] sm:$0xff]
    %v243 = vld [vmem:[#allocation7 + $0x8] sm:$0xff]
    %v244 = vld [vmem:[#allocation7 + $0x10] sm:$0xff]
    %v245 = vld [vmem:[#allocation7 + $0x18] sm:$0xff]
    %v246 = vld [vmem:[#allocation7 + $0x20] sm:$0xff]
    %v247 = vld [vmem:[#allocation7 + $0x28] sm:$0xff]
    %v248 = vld [vmem:[#allocation7 + $0x30] sm:$0xff]
    %v249 = vld [vmem:[#allocation7 + $0x38] sm:$0xff]
    %v250 = vld [vmem:[#allocation7 + $0x40] sm:$0xff]
    %v251 = vld [vmem:[#allocation7 + $0x48] sm:$0xff]
    %v252 = vld [vmem:[#allocation7 + $0x50] sm:$0xff]
    %v253 = vld [vmem:[#allocation7 + $0x58] sm:$0xff]
    %v254 = vld [vmem:[#allocation7 + $0x60] sm:$0xff]
    %v255 = vld [vmem:[#allocation7 + $0x68] sm:$0xff]
    %v256 = vld [vmem:[#allocation7 + $0x70] sm:$0xff]
    %v257 = vld [vmem:[#allocation7 + $0x78] sm:$0xff]
    %v258 = vld [vmem:[%s4] sm:$0x1]
    %v260 = vlaneseq
    %v261 = vshrl.u32 %v260, 7
    %v262 = vsub.s32 0, %v261
    %v263 = vrot.slane %v258, %v262
    %265 = vmatprep.subr.mxu0 0.0
    %266 = vmatpush1.msra.mxu0 %v242
    %267 = vmatprep.subr.mxu0 0.0
    %268 = vmatpush1.msra.mxu0 %v243
    %269 = vmatprep.subr.mxu0 0.0
    %270 = vmatpush1.msra.mxu0 %v244
    %271 = vmatprep.subr.mxu0 0.0
    %272 = vmatpush1.msra.mxu0 %v245
    %273 = vmatprep.subr.mxu0 0.0
    %274 = vmatpush1.msra.mxu0 %v246
    %275 = vmatprep.subr.mxu0 0.0
    %276 = vmatpush1.msra.mxu0 %v247
    %277 = vmatprep.subr.mxu0 0.0
    %278 = vmatpush1.msra.mxu0 %v248
    %279 = vmatprep.subr.mxu0 0.0
    %280 = vmatpush1.msra.mxu0 %v249
    %281 = vmatprep.subr.mxu0 0.0
    %282 = vmatpush1.msra.mxu0 %v250
    %283 = vmatprep.subr.mxu0 0.0
    %284 = vmatpush1.msra.mxu0 %v251
    %285 = vmatprep.subr.mxu0 0.0
    %286 = vmatpush1.msra.mxu0 %v252
    %287 = vmatprep.subr.mxu0 0.0
    %288 = vmatpush1.msra.mxu0 %v253
    %289 = vmatprep.subr.mxu0 0.0
    %290 = vmatpush1.msra.mxu0 %v254
    %291 = vmatprep.subr.mxu0 0.0
    %292 = vmatpush1.msra.mxu0 %v255
    %293 = vmatprep.subr.mxu0 0.0
    %294 = vmatpush1.msra.mxu0 %v256
    %295 = vmatprep.subr.mxu0 0.0
    %296 = vmatpush1.msra.mxu0 %v257
    %297 = vmatprep.subr.mxu0 0.0
    %298 = vmatpush1.msra.mxu0 0.0
    %299 = vmatprep.subr.mxu0 0.0
    %300 = vmatpush1.msra.mxu0 0.0
    %301 = vmatprep.subr.mxu0 0.0
    %302 = vmatpush1.msra.mxu0 0.0
    %303 = vmatprep.subr.mxu0 0.0
    %304 = vmatpush1.msra.mxu0 0.0
    %305 = vmatprep.subr.mxu0 0.0
    %306 = vmatpush1.msra.mxu0 0.0
    %307 = vmatprep.subr.mxu0 0.0
    %308 = vmatpush1.msra.mxu0 0.0
    %309 = vmatprep.subr.mxu0 0.0
    %310 = vmatpush1.msra.mxu0 0.0
    %311 = vmatprep.subr.mxu0 0.0
    %312 = vmatpush1.msra.mxu0 0.0
    %313 = vmatprep.subr.mxu0 0.0
    %314 = vmatpush1.msra.mxu0 0.0
    %315 = vmatprep.subr.mxu0 0.0
    %316 = vmatpush1.msra.mxu0 0.0
    %317 = vmatprep.subr.mxu0 0.0
    %318 = vmatpush1.msra.mxu0 0.0
    %319 = vmatprep.subr.mxu0 0.0
    %320 = vmatpush1.msra.mxu0 0.0
    %321 = vmatprep.subr.mxu0 0.0
    %322 = vmatpush1.msra.mxu0 0.0
    %323 = vmatprep.subr.mxu0 0.0
    %324 = vmatpush1.msra.mxu0 0.0
    %325 = vmatprep.subr.mxu0 0.0
    %326 = vmatpush1.msra.mxu0 0.0
    %327 = vmatprep.subr.mxu0 0.0
    %328 = vmatpush1.msra.mxu0 0.0
    %329 = vmatprep.mubr.f32.mxu0 0.0
    %330 = vmatmul.mubr.f32.gmra.mrb[0].mxu0 %v241
    %v331 = vpop.f32.mrb[0].mxu0
    %v332 = vadd.f32 %v263, %v331
    %v333 = vpop.f32.mrb[0].mxu0
    %334 = vdwg.mxu0
    %v335 = vmax.f32 %v332, 0.0
    %v336 = vld [vmem:[#allocation8] sm:$0xff]
    %v337 = vld [vmem:[#allocation8 + $0x8] sm:$0xff]
    %v338 = vld [vmem:[#allocation8 + $0x10] sm:$0xff]
    %v339 = vld [vmem:[#allocation8 + $0x18] sm:$0xff]
    %v340 = vld [vmem:[#allocation8 + $0x20] sm:$0xff]
    %v341 = vld [vmem:[#allocation8 + $0x28] sm:$0xff]
    %v342 = vld [vmem:[#allocation8 + $0x30] sm:$0xff]
    %v343 = vld [vmem:[#allocation8 + $0x38] sm:$0xff]
    %v344 = vld [vmem:[#allocation8 + $0x40] sm:$0xff]
    %v345 = vld [vmem:[#allocation8 + $0x48] sm:$0xff]
    %v346 = vld [vmem:[#allocation8 + $0x50] sm:$0xff]
    %v347 = vld [vmem:[#allocation8 + $0x58] sm:$0xff]
    %v348 = vld [vmem:[#allocation8 + $0x60] sm:$0xff]
    %v349 = vld [vmem:[#allocation8 + $0x68] sm:$0xff]
    %v350 = vld [vmem:[#allocation8 + $0x70] sm:$0xff]
    %v351 = vld [vmem:[#allocation8 + $0x78] sm:$0xff]
    %v352 = vld [vmem:[%s6] sm:$0x1]
    %v354 = vlaneseq
    %v355 = vshrl.u32 %v354, 7
    %v356 = vsub.s32 0, %v355
    %v357 = vrot.slane %v352, %v356
    %359 = vmatprep.subr.mxu0 0.0
    %360 = vmatpush1.msra.mxu0 %v336
    %361 = vmatprep.subr.mxu0 0.0
    %362 = vmatpush1.msra.mxu0 %v337
    %363 = vmatprep.subr.mxu0 0.0
    %364 = vmatpush1.msra.mxu0 %v338
    %365 = vmatprep.subr.mxu0 0.0
    %366 = vmatpush1.msra.mxu0 %v339
    %367 = vmatprep.subr.mxu0 0.0
    %368 = vmatpush1.msra.mxu0 %v340
    %369 = vmatprep.subr.mxu0 0.0
    %370 = vmatpush1.msra.mxu0 %v341
    %371 = vmatprep.subr.mxu0 0.0
    %372 = vmatpush1.msra.mxu0 %v342
    %373 = vmatprep.subr.mxu0 0.0
    %374 = vmatpush1.msra.mxu0 %v343
    %375 = vmatprep.subr.mxu0 0.0
    %376 = vmatpush1.msra.mxu0 %v344
    %377 = vmatprep.subr.mxu0 0.0
    %378 = vmatpush1.msra.mxu0 %v345
    %379 = vmatprep.subr.mxu0 0.0
    %380 = vmatpush1.msra.mxu0 %v346
    %381 = vmatprep.subr.mxu0 0.0
    %382 = vmatpush1.msra.mxu0 %v347
    %383 = vmatprep.subr.mxu0 0.0
    %384 = vmatpush1.msra.mxu0 %v348
    %385 = vmatprep.subr.mxu0 0.0
    %386 = vmatpush1.msra.mxu0 %v349
    %387 = vmatprep.subr.mxu0 0.0
    %388 = vmatpush1.msra.mxu0 %v350
    %389 = vmatprep.subr.mxu0 0.0
    %390 = vmatpush1.msra.mxu0 %v351
    %391 = vmatprep.subr.mxu0 0.0
    %392 = vmatpush1.msra.mxu0 0.0
    %393 = vmatprep.subr.mxu0 0.0
    %394 = vmatpush1.msra.mxu0 0.0
    %395 = vmatprep.subr.mxu0 0.0
    %396 = vmatpush1.msra.mxu0 0.0
    %397 = vmatprep.subr.mxu0 0.0
    %398 = vmatpush1.msra.mxu0 0.0
    %399 = vmatprep.subr.mxu0 0.0
    %400 = vmatpush1.msra.mxu0 0.0
    %401 = vmatprep.subr.mxu0 0.0
    %402 = vmatpush1.msra.mxu0 0.0
    %403 = vmatprep.subr.mxu0 0.0
    %404 = vmatpush1.msra.mxu0 0.0
    %405 = vmatprep.subr.mxu0 0.0
    %406 = vmatpush1.msra.mxu0 0.0
    %407 = vmatprep.subr.mxu0 0.0
    %408 = vmatpush1.msra.mxu0 0.0
    %409 = vmatprep.subr.mxu0 0.0
    %410 = vmatpush1.msra.mxu0 0.0
    %411 = vmatprep.subr.mxu0 0.0
    %412 = vmatpush1.msra.mxu0 0.0
    %413 = vmatprep.subr.mxu0 0.0
    %414 = vmatpush1.msra.mxu0 0.0
    %415 = vmatprep.subr.mxu0 0.0
    %416 = vmatpush1.msra.mxu0 0.0
    %417 = vmatprep.subr.mxu0 0.0
    %418 = vmatpush1.msra.mxu0 0.0
    %419 = vmatprep.subr.mxu0 0.0
    %420 = vmatpush1.msra.mxu0 0.0
    %421 = vmatprep.subr.mxu0 0.0
    %422 = vmatpush1.msra.mxu0 0.0
    %423 = vmatprep.mubr.f32.mxu0 0.0
    %424 = vmatmul.mubr.f32.gmra.mrb[0].mxu0 %v335
    %v425 = vpop.f32.mrb[0].mxu0
    %v426 = vadd.f32 %v357, %v425
    %v427 = vpop.f32.mrb[0].mxu0
    %428 = vdwg.mxu0
    %v429 = vld [vmem:[#allocation10] sm:$0xff]
    %v430 = vld [vmem:[#allocation10 + $0x8] sm:$0xff]
    %v431 = vld [vmem:[#allocation10 + $0x10] sm:$0xff]
    %v432 = vld [vmem:[#allocation10 + $0x18] sm:$0xff]
    %v433 = vld [vmem:[#allocation10 + $0x20] sm:$0xff]
    %v434 = vld [vmem:[#allocation10 + $0x28] sm:$0xff]
    %v435 = vld [vmem:[#allocation10 + $0x30] sm:$0xff]
    %v436 = vld [vmem:[#allocation10 + $0x38] sm:$0xff]
    %v437 = vld [vmem:[#allocation10 + $0x40] sm:$0xff]
    %v438 = vld [vmem:[#allocation10 + $0x48] sm:$0xff]
    %v439 = vld [vmem:[#allocation10 + $0x50] sm:$0xff]
    %v440 = vld [vmem:[#allocation10 + $0x58] sm:$0xff]
    %v441 = vld [vmem:[#allocation10 + $0x60] sm:$0xff]
    %v442 = vld [vmem:[#allocation10 + $0x68] sm:$0xff]
    %v443 = vld [vmem:[#allocation10 + $0x70] sm:$0xff]
    %v444 = vld [vmem:[#allocation10 + $0x78] sm:$0xff]
    %445 = vmatprep.subr.mxu0 0.0
    %446 = vmatpush1.msra.mxu0 %v429
    %447 = vmatprep.subr.mxu0 0.0
    %448 = vmatpush1.msra.mxu0 %v430
    %449 = vmatprep.subr.mxu0 0.0
    %450 = vmatpush1.msra.mxu0 %v431
    %451 = vmatprep.subr.mxu0 0.0
    %452 = vmatpush1.msra.mxu0 %v432
    %453 = vmatprep.subr.mxu0 0.0
    %454 = vmatpush1.msra.mxu0 %v433
    %455 = vmatprep.subr.mxu0 0.0
    %456 = vmatpush1.msra.mxu0 %v434
    %457 = vmatprep.subr.mxu0 0.0
    %458 = vmatpush1.msra.mxu0 %v435
    %459 = vmatprep.subr.mxu0 0.0
    %460 = vmatpush1.msra.mxu0 %v436
    %461 = vmatprep.subr.mxu0 0.0
    %462 = vmatpush1.msra.mxu0 %v437
    %463 = vmatprep.subr.mxu0 0.0
    %464 = vmatpush1.msra.mxu0 %v438
    %465 = vmatprep.subr.mxu0 0.0
    %466 = vmatpush1.msra.mxu0 %v439
    %467 = vmatprep.subr.mxu0 0.0
    %468 = vmatpush1.msra.mxu0 %v440
    %469 = vmatprep.subr.mxu0 0.0
    %470 = vmatpush1.msra.mxu0 %v441
    %471 = vmatprep.subr.mxu0 0.0
    %472 = vmatpush1.msra.mxu0 %v442
    %473 = vmatprep.subr.mxu0 0.0
    %474 = vmatpush1.msra.mxu0 %v443
    %475 = vmatprep.subr.mxu0 0.0
    %476 = vmatpush1.msra.mxu0 %v444
    %477 = vmatprep.subr.mxu0 0.0
    %478 = vmatpush1.msra.mxu0 0.0
    %479 = vmatprep.subr.mxu0 0.0
    %480 = vmatpush1.msra.mxu0 0.0
    %481 = vmatprep.subr.mxu0 0.0
    %482 = vmatpush1.msra.mxu0 0.0
    %483 = vmatprep.subr.mxu0 0.0
    %484 = vmatpush1.msra.mxu0 0.0
    %485 = vmatprep.subr.mxu0 0.0
    %486 = vmatpush1.msra.mxu0 0.0
    %487 = vmatprep.subr.mxu0 0.0
    %488 = vmatpush1.msra.mxu0 0.0
    %489 = vmatprep.subr.mxu0 0.0
    %490 = vmatpush1.msra.mxu0 0.0
    %491 = vmatprep.subr.mxu0 0.0
    %492 = vmatpush1.msra.mxu0 0.0
    %493 = vmatprep.subr.mxu0 0.0
    %494 = vmatpush1.msra.mxu0 0.0
    %495 = vmatprep.subr.mxu0 0.0
    %496 = vmatpush1.msra.mxu0 0.0
    %497 = vmatprep.subr.mxu0 0.0
    %498 = vmatpush1.msra.mxu0 0.0
    %499 = vmatprep.subr.mxu0 0.0
    %500 = vmatpush1.msra.mxu0 0.0
    %501 = vmatprep.subr.mxu0 0.0
    %502 = vmatpush1.msra.mxu0 0.0
    %503 = vmatprep.subr.mxu0 0.0
    %504 = vmatpush1.msra.mxu0 0.0
    %505 = vmatprep.subr.mxu0 0.0
    %506 = vmatpush1.msra.mxu0 0.0
    %507 = vmatprep.subr.mxu0 0.0
    %508 = vmatpush1.msra.mxu0 0.0
    %509 = vmatprep.mubr.f32.mxu0 0.0
    %510 = vmatmul.mubr.f32.gmra.mrb[0].mxu0 %v426
    %v511 = vpop.f32.mrb[0].mxu0
    %v512 = vadd.f32 0.0, %v511
    %v513 = vpop.f32.mrb[0].mxu0
    %514 = vdwg.mxu0
    %v515 = vld [vmem:[%s8] sm:$0x1]
    %vm516 = vcmp.gt.f32.partialorder %v515, 0.5
    %v517 = vand.u32 2147483647, %v512
    %v518 = vmul.f32 %v517, 2.0
    %v519 = vadd.f32 %v518, 1e-08
    %v520 = vsel %vm516, 1, 0
    %v521 = vlaneseq
    %v522 = vshrl.u32 %v521, 7
    %v523 = vsub.s32 0, %v522
    %v524 = vrot.slane %v520, %v523
    %vm525 = vcmp.eq.s32.totalorder %v524, 1
    %v526 = vsel %vm525, %v519, %v512
    %527 = vst [vmem:[#allocation14] sm:$0x3] %v526
    %v528 = vld [vmem:[%s9] sm:$0xff]
    %v529 = vld [vmem:[%s10] sm:$0x1]
    %v531 = vlaneseq
    %v532 = vshrl.u32 %v531, 7
    %v533 = vsub.s32 0, %v532
    %v534 = vrot.slane %v529, %v533
    %vm536 = vcmask 64512
    %v538 = vsel %vm536, %v526, 0
    %540 = vmatprep.subr.mxu0 0.0
    %541 = vmatpush1.msra.mxu0 %v528
    %542 = vmatprep.subr.mxu0 0.0
    %543 = vmatpush1.msra.mxu0 0.0
    %544 = vmatprep.subr.mxu0 0.0
    %545 = vmatpush1.msra.mxu0 0.0
    %546 = vmatprep.subr.mxu0 0.0
    %547 = vmatpush1.msra.mxu0 0.0
    %548 = vmatprep.subr.mxu0 0.0
    %549 = vmatpush1.msra.mxu0 0.0
    %550 = vmatprep.subr.mxu0 0.0
    %551 = vmatpush1.msra.mxu0 0.0
    %552 = vmatprep.subr.mxu0 0.0
    %553 = vmatpush1.msra.mxu0 0.0
    %554 = vmatprep.subr.mxu0 0.0
    %555 = vmatpush1.msra.mxu0 0.0
    %556 = vmatprep.subr.mxu0 0.0
    %557 = vmatpush1.msra.mxu0 0.0
    %558 = vmatprep.subr.mxu0 0.0
    %559 = vmatpush1.msra.mxu0 0.0
    %560 = vmatprep.subr.mxu0 0.0
    %561 = vmatpush1.msra.mxu0 0.0
    %562 = vmatprep.subr.mxu0 0.0
    %563 = vmatpush1.msra.mxu0 0.0
    %564 = vmatprep.subr.mxu0 0.0
    %565 = vmatpush1.msra.mxu0 0.0
    %566 = vmatprep.subr.mxu0 0.0
    %567 = vmatpush1.msra.mxu0 0.0
    %568 = vmatprep.subr.mxu0 0.0
    %569 = vmatpush1.msra.mxu0 0.0
    %570 = vmatprep.subr.mxu0 0.0
    %571 = vmatpush1.msra.mxu0 0.0
    %572 = vmatprep.subr.mxu0 0.0
    %573 = vmatpush1.msra.mxu0 0.0
    %574 = vmatprep.subr.mxu0 0.0
    %575 = vmatpush1.msra.mxu0 0.0
    %576 = vmatprep.subr.mxu0 0.0
    %577 = vmatpush1.msra.mxu0 0.0
    %578 = vmatprep.subr.mxu0 0.0
    %579 = vmatpush1.msra.mxu0 0.0
    %580 = vmatprep.subr.mxu0 0.0
    %581 = vmatpush1.msra.mxu0 0.0
    %582 = vmatprep.subr.mxu0 0.0
    %583 = vmatpush1.msra.mxu0 0.0
    %584 = vmatprep.subr.mxu0 0.0
    %585 = vmatpush1.msra.mxu0 0.0
    %586 = vmatprep.subr.mxu0 0.0
    %587 = vmatpush1.msra.mxu0 0.0
    %588 = vmatprep.subr.mxu0 0.0
    %589 = vmatpush1.msra.mxu0 0.0
    %590 = vmatprep.subr.mxu0 0.0
    %591 = vmatpush1.msra.mxu0 0.0
    %592 = vmatprep.subr.mxu0 0.0
    %593 = vmatpush1.msra.mxu0 0.0
    %594 = vmatprep.subr.mxu0 0.0
    %595 = vmatpush1.msra.mxu0 0.0
    %596 = vmatprep.subr.mxu0 0.0
    %597 = vmatpush1.msra.mxu0 0.0
    %598 = vmatprep.subr.mxu0 0.0
    %599 = vmatpush1.msra.mxu0 0.0
    %600 = vmatprep.subr.mxu0 0.0
    %601 = vmatpush1.msra.mxu0 0.0
    %602 = vmatprep.subr.mxu0 0.0
    %603 = vmatpush1.msra.mxu0 0.0
    %604 = vmatprep.mubr.f32.mxu0 0.0
    %605 = vmatmul.mubr.f32.gmra.mrb[0].mxu0 %v538
    %v606 = vpop.f32.mrb[0].mxu0
    %v607 = vadd.f32 %v534, %v606
    %v608 = vpop.f32.mrb[0].mxu0
    %609 = vdwg.mxu0
    %v610 = vmax.f32 %v607, 0.0
    %v611 = vld [vmem:[#allocation11] sm:$0xff]
    %v612 = vld [vmem:[#allocation11 + $0x8] sm:$0xff]
    %v613 = vld [vmem:[#allocation11 + $0x10] sm:$0xff]
    %v614 = vld [vmem:[#allocation11 + $0x18] sm:$0xff]
    %v615 = vld [vmem:[#allocation11 + $0x20] sm:$0xff]
    %v616 = vld [vmem:[#allocation11 + $0x28] sm:$0xff]
    %v617 = vld [vmem:[#allocation11 + $0x30] sm:$0xff]
    %v618 = vld [vmem:[#allocation11 + $0x38] sm:$0xff]
    %v619 = vld [vmem:[#allocation11 + $0x40] sm:$0xff]
    %v620 = vld [vmem:[#allocation11 + $0x48] sm:$0xff]
    %v621 = vld [vmem:[#allocation11 + $0x50] sm:$0xff]
    %v622 = vld [vmem:[#allocation11 + $0x58] sm:$0xff]
    %v623 = vld [vmem:[#allocation11 + $0x60] sm:$0xff]
    %v624 = vld [vmem:[#allocation11 + $0x68] sm:$0xff]
    %v625 = vld [vmem:[#allocation11 + $0x70] sm:$0xff]
    %v626 = vld [vmem:[#allocation11 + $0x78] sm:$0xff]
    %v627 = vld [vmem:[%s12] sm:$0x1]
    %v629 = vlaneseq
    %v630 = vshrl.u32 %v629, 7
    %v631 = vsub.s32 0, %v630
    %v632 = vrot.slane %v627, %v631
    %634 = vmatprep.subr.mxu0 0.0
    %635 = vmatpush1.msra.mxu0 %v611
    %636 = vmatprep.subr.mxu0 0.0
    %637 = vmatpush1.msra.mxu0 %v612
    %638 = vmatprep.subr.mxu0 0.0
    %639 = vmatpush1.msra.mxu0 %v613
    %640 = vmatprep.subr.mxu0 0.0
    %641 = vmatpush1.msra.mxu0 %v614
    %642 = vmatprep.subr.mxu0 0.0
    %643 = vmatpush1.msra.mxu0 %v615
    %644 = vmatprep.subr.mxu0 0.0
    %645 = vmatpush1.msra.mxu0 %v616
    %646 = vmatprep.subr.mxu0 0.0
    %647 = vmatpush1.msra.mxu0 %v617
    %648 = vmatprep.subr.mxu0 0.0
    %649 = vmatpush1.msra.mxu0 %v618
    %650 = vmatprep.subr.mxu0 0.0
    %651 = vmatpush1.msra.mxu0 %v619
    %652 = vmatprep.subr.mxu0 0.0
    %653 = vmatpush1.msra.mxu0 %v620
    %654 = vmatprep.subr.mxu0 0.0
    %655 = vmatpush1.msra.mxu0 %v621
    %656 = vmatprep.subr.mxu0 0.0
    %657 = vmatpush1.msra.mxu0 %v622
    %658 = vmatprep.subr.mxu0 0.0
    %659 = vmatpush1.msra.mxu0 %v623
    %660 = vmatprep.subr.mxu0 0.0
    %661 = vmatpush1.msra.mxu0 %v624
    %662 = vmatprep.subr.mxu0 0.0
    %663 = vmatpush1.msra.mxu0 %v625
    %664 = vmatprep.subr.mxu0 0.0
    %665 = vmatpush1.msra.mxu0 %v626
    %666 = vmatprep.subr.mxu0 0.0
    %667 = vmatpush1.msra.mxu0 0.0
    %668 = vmatprep.subr.mxu0 0.0
    %669 = vmatpush1.msra.mxu0 0.0
    %670 = vmatprep.subr.mxu0 0.0
    %671 = vmatpush1.msra.mxu0 0.0
    %672 = vmatprep.subr.mxu0 0.0
    %673 = vmatpush1.msra.mxu0 0.0
    %674 = vmatprep.subr.mxu0 0.0
    %675 = vmatpush1.msra.mxu0 0.0
    %676 = vmatprep.subr.mxu0 0.0
    %677 = vmatpush1.msra.mxu0 0.0
    %678 = vmatprep.subr.mxu0 0.0
    %679 = vmatpush1.msra.mxu0 0.0
    %680 = vmatprep.subr.mxu0 0.0
    %681 = vmatpush1.msra.mxu0 0.0
    %682 = vmatprep.subr.mxu0 0.0
    %683 = vmatpush1.msra.mxu0 0.0
    %684 = vmatprep.subr.mxu0 0.0
    %685 = vmatpush1.msra.mxu0 0.0
    %686 = vmatprep.subr.mxu0 0.0
    %687 = vmatpush1.msra.mxu0 0.0
    %688 = vmatprep.subr.mxu0 0.0
    %689 = vmatpush1.msra.mxu0 0.0
    %690 = vmatprep.subr.mxu0 0.0
    %691 = vmatpush1.msra.mxu0 0.0
    %692 = vmatprep.subr.mxu0 0.0
    %693 = vmatpush1.msra.mxu0 0.0
    %694 = vmatprep.subr.mxu0 0.0
    %695 = vmatpush1.msra.mxu0 0.0
    %696 = vmatprep.subr.mxu0 0.0
    %697 = vmatpush1.msra.mxu0 0.0
    %698 = vmatprep.mubr.f32.mxu0 0.0
    %699 = vmatmul.mubr.f32.gmra.mrb[0].mxu0 %v610
    %v700 = vpop.f32.mrb[0].mxu0
    %v701 = vadd.f32 %v632, %v700
    %v702 = vpop.f32.mrb[0].mxu0
    %703 = vdwg.mxu0
    %v704 = vmax.f32 %v701, 0.0
    %v705 = vld [vmem:[#allocation13] sm:$0xff]
    %v706 = vld [vmem:[#allocation13 + $0x8] sm:$0xff]
    %v707 = vld [vmem:[#allocation13 + $0x10] sm:$0xff]
    %v708 = vld [vmem:[#allocation13 + $0x18] sm:$0xff]
    %v709 = vld [vmem:[#allocation13 + $0x20] sm:$0xff]
    %v710 = vld [vmem:[#allocation13 + $0x28] sm:$0xff]
    %v711 = vld [vmem:[#allocation13 + $0x30] sm:$0xff]
    %v712 = vld [vmem:[#allocation13 + $0x38] sm:$0xff]
    %v713 = vld [vmem:[#allocation13 + $0x40] sm:$0xff]
    %v714 = vld [vmem:[#allocation13 + $0x48] sm:$0xff]
    %v715 = vld [vmem:[#allocation13 + $0x50] sm:$0xff]
    %v716 = vld [vmem:[#allocation13 + $0x58] sm:$0xff]
    %v717 = vld [vmem:[#allocation13 + $0x60] sm:$0xff]
    %v718 = vld [vmem:[#allocation13 + $0x68] sm:$0xff]
    %v719 = vld [vmem:[#allocation13 + $0x70] sm:$0xff]
    %v720 = vld [vmem:[#allocation13 + $0x78] sm:$0xff]
    %v721 = vld [vmem:[%s14] sm:$0x1]
    %v723 = vlaneseq
    %v724 = vshrl.u32 %v723, 7
    %v725 = vsub.s32 0, %v724
    %v726 = vrot.slane %v721, %v725
    %728 = vmatprep.subr.mxu0 0.0
    %729 = vmatpush1.msra.mxu0 %v705
    %730 = vmatprep.subr.mxu0 0.0
    %731 = vmatpush1.msra.mxu0 %v706
    %732 = vmatprep.subr.mxu0 0.0
    %733 = vmatpush1.msra.mxu0 %v707
    %734 = vmatprep.subr.mxu0 0.0
    %735 = vmatpush1.msra.mxu0 %v708
    %736 = vmatprep.subr.mxu0 0.0
    %737 = vmatpush1.msra.mxu0 %v709
    %738 = vmatprep.subr.mxu0 0.0
    %739 = vmatpush1.msra.mxu0 %v710
    %740 = vmatprep.subr.mxu0 0.0
    %741 = vmatpush1.msra.mxu0 %v711
    %742 = vmatprep.subr.mxu0 0.0
    %743 = vmatpush1.msra.mxu0 %v712
    %744 = vmatprep.subr.mxu0 0.0
    %745 = vmatpush1.msra.mxu0 %v713
    %746 = vmatprep.subr.mxu0 0.0
    %747 = vmatpush1.msra.mxu0 %v714
    %748 = vmatprep.subr.mxu0 0.0
    %749 = vmatpush1.msra.mxu0 %v715
    %750 = vmatprep.subr.mxu0 0.0
    %751 = vmatpush1.msra.mxu0 %v716
    %752 = vmatprep.subr.mxu0 0.0
    %753 = vmatpush1.msra.mxu0 %v717
    %754 = vmatprep.subr.mxu0 0.0
    %755 = vmatpush1.msra.mxu0 %v718
    %756 = vmatprep.subr.mxu0 0.0
    %757 = vmatpush1.msra.mxu0 %v719
    %758 = vmatprep.subr.mxu0 0.0
    %759 = vmatpush1.msra.mxu0 %v720
    %760 = vmatprep.subr.mxu0 0.0
    %761 = vmatpush1.msra.mxu0 0.0
    %762 = vmatprep.subr.mxu0 0.0
    %763 = vmatpush1.msra.mxu0 0.0
    %764 = vmatprep.subr.mxu0 0.0
    %765 = vmatpush1.msra.mxu0 0.0
    %766 = vmatprep.subr.mxu0 0.0
    %767 = vmatpush1.msra.mxu0 0.0
    %768 = vmatprep.subr.mxu0 0.0
    %769 = vmatpush1.msra.mxu0 0.0
    %770 = vmatprep.subr.mxu0 0.0
    %771 = vmatpush1.msra.mxu0 0.0
    %772 = vmatprep.subr.mxu0 0.0
    %773 = vmatpush1.msra.mxu0 0.0
    %774 = vmatprep.subr.mxu0 0.0
    %775 = vmatpush1.msra.mxu0 0.0
    %776 = vmatprep.subr.mxu0 0.0
    %777 = vmatpush1.msra.mxu0 0.0
    %778 = vmatprep.subr.mxu0 0.0
    %779 = vmatpush1.msra.mxu0 0.0
    %780 = vmatprep.subr.mxu0 0.0
    %781 = vmatpush1.msra.mxu0 0.0
    %782 = vmatprep.subr.mxu0 0.0
    %783 = vmatpush1.msra.mxu0 0.0
    %784 = vmatprep.subr.mxu0 0.0
    %785 = vmatpush1.msra.mxu0 0.0
    %786 = vmatprep.subr.mxu0 0.0
    %787 = vmatpush1.msra.mxu0 0.0
    %788 = vmatprep.subr.mxu0 0.0
    %789 = vmatpush1.msra.mxu0 0.0
    %790 = vmatprep.subr.mxu0 0.0
    %791 = vmatpush1.msra.mxu0 0.0
    %792 = vmatprep.mubr.f32.mxu0 0.0
    %793 = vmatmul.mubr.f32.gmra.mrb[0].mxu0 %v704
    %v794 = vpop.f32.mrb[0].mxu0
    %v795 = vadd.f32 %v726, %v794
    %v796 = vpop.f32.mrb[0].mxu0
    %797 = vdwg.mxu0
    %798 = vst [vmem:[#allocation15] sm:$0x3] %v795
    // Predicated region
    $region90: #{tpu_custom_call.1} parent=1 // pred_check
      _
    $region91: #{tpu_custom_call.1} parent=1 // pred_check_branch
      %800 = sbr.rel (0) target = $region93
    $region92: #{tpu_custom_call.1} parent=1 // pred_region
      %s802 = ssub.s32 32, 32
      %803 = vsyncadd [#allocation4], %s802
      %s805 = sshll.u32 [#allocation14], 4
      %s806 = int_to_ptr.vmem [resolvable:$true] %s805
      %808 = dma.vmem_to_hbm [thread:$0]  %s806, 32, %s15, [#allocation4]
    $region93: #{tpu_custom_call.1} parent=1 // pred_fallthru
      _
    // Predicated region
    $region94: #{tpu_custom_call.1} parent=1 // pred_check
      _
    $region95: #{tpu_custom_call.1} parent=1 // pred_check_branch
      %810 = sbr.rel (0) target = $region97
    $region96: #{tpu_custom_call.1} parent=1 // pred_region
      %s812 = ssub.s32 32, 32
      %813 = vsyncadd [#allocation16], %s812
      %s815 = sshll.u32 [#allocation15], 4
      %s816 = int_to_ptr.vmem [resolvable:$true] %s815
      %818 = dma.vmem_to_hbm [thread:$0]  %s816, 32, %s16, [#allocation16]
    $region97: #{tpu_custom_call.1} parent=1 // pred_fallthru
      _
    // Predicated region
    $region98: #{tpu_custom_call.1} parent=1 // pred_check
      _
    $region99: #{tpu_custom_call.1} parent=1 // pred_check_branch
      %820 = sbr.rel (0) target = $region101
    $region100: #{tpu_custom_call.1} parent=1 // pred_region
      %821 = dma.done [#allocation4], 32
    $region101: #{tpu_custom_call.1} parent=1 // pred_fallthru
      _
    // Predicated region
    $region102: #{tpu_custom_call.1} parent=1 // pred_check
      _
    $region103: #{tpu_custom_call.1} parent=1 // pred_check_branch
      %823 = sbr.rel (0) target = $region105
    $region104: #{tpu_custom_call.1} parent=1 // pred_region
      %824 = dma.done [#allocation16], 32
    $region105: #{tpu_custom_call.1} parent=1 // pred_fallthru
      _
    %825 = vsyncpa [#allocation3], 1
    %826 = vsyncpa [#allocation6], 1
    %827 = vsyncpa [#allocation9], 1
    %828 = vsyncpa [#allocation12], 1
    %829 = vsyncpa [#allocation4], 1
    %830 = vsyncpa [#allocation16], 1

</llo_original>
